<compile_context>
chip_gen: v6e
topology: v6e:2x2x1
jax: 0.10.0
libtpu: 0.0.40
codegen_flags: <defaults>
</compile_context>

<pallas_src>
import functools

import jax
import jax.numpy as jnp
from jax import lax
from jax.experimental import pallas as pl
from jax.experimental.pallas import tpu as pltpu

_LANES = 128
_TARGET_BLOCK_BYTES = 4 * 1024 * 1024  # ~4 MiB per input buffer


def _round_up(x, m):
    return ((x + m - 1) // m) * m


def _cdiv(a, b):
    return (a + b - 1) // b


def _tensorcores_per_chip():
    """Best-effort TensorCores-per-chip (2 on v7x, 1 on v5e/v6e)."""
    try:
        kind = str(jax.devices()[0].device_kind).lower()
    except Exception:
        return 1
    if "v7" in kind or "7x" in kind:
        return 2
    return 1


def _elementwise_transform(x, *, gan_type, target_is_real, is_disc, target_val):
    """Per-element loss term f(x); sum(f) * sign * weight / N is the loss."""
    if gan_type == "vanilla":
        # BCEWithLogitsLoss with constant target t (numerically stable form):
        #   max(x, 0) - x * t + log1p(exp(-|x|))
        t = jnp.float32(target_val)
        return jnp.maximum(x, 0.0) - x * t + jnp.log1p(jnp.exp(-jnp.abs(x)))
    if gan_type == "lsgan":
        d = x - jnp.float32(target_val)
        return d * d
    if gan_type in ("wgan", "standard"):
        return x  # sign folded into the final scale
    if gan_type == "wgan_softplus":
        z = -x if target_is_real else x
        return jnp.logaddexp(z, 0.0)  # softplus(z)
    if gan_type == "hinge":
        if is_disc:
            z = -x if target_is_real else x
            return jnp.maximum(1.0 + z, 0.0)  # ReLU(1 + z)
        return x  # generator: -mean(x); sign folded into final scale
    raise NotImplementedError(f"GAN type {gan_type} is not implemented.")


def _ganloss_kernel(x_ref, out_ref, *, gan_type, target_is_real, is_disc,
                    target_val, block_rows, blocks_per_core, num_blocks,
                    grid_blocks, rows):
    c = pl.program_id(0)  # core axis (size 1 on single-TC chips)
    i = pl.program_id(1)  # "arbitrary" reduction axis

    @pl.when(i == 0)
    def _():
        out_ref[...] = jnp.zeros_like(out_ref)

    blk = c * blocks_per_core + i  # global block id this step intends to cover

    def accumulate(mask_rows):
        x = x_ref[...].astype(jnp.float32)
        f = _elementwise_transform(
            x, gan_type=gan_type, target_is_real=target_is_real,
            is_disc=is_disc, target_val=target_val)
        if mask_rows:
            # Only emitted for (and executed on) the last, partial block.
            row = lax.broadcasted_iota(jnp.int32, (block_rows, _LANES), 0)
            valid_rows = rows - blk * block_rows
            f = jnp.where(row < valid_rows, f, 0.0)
        # Reduce block to one (8,128) vreg.  Two-stage reshape keeps 8
        # independent full-vreg add chains (VALU ILP) for large blocks.
        if block_rows % 64 == 0:
            p = jnp.sum(f.reshape(block_rows // 64, 8, 8, _LANES), axis=0)
            out_ref[...] += jnp.sum(p, axis=0, keepdims=True)
        else:
            out_ref[...] += jnp.sum(
                f.reshape(block_rows // 8, 8, _LANES), axis=0, keepdims=True)

    has_partial = (rows % block_rows) != 0   # last real block is row-padded
    has_extra = grid_blocks > num_blocks     # clamped duplicate coverage block(s)

    if not has_partial and not has_extra:
        accumulate(False)                    # fast path: every step is a full block
    else:
        n_full = num_blocks - 1 if has_partial else num_blocks
        if n_full > 0:
            @pl.when(blk < n_full)
            def _():
                accumulate(False)
        if has_partial:
            @pl.when(blk == num_blocks - 1)
            def _():
                accumulate(True)
        # blk >= num_blocks (duplicate coverage blocks): compute skipped.


class GANLoss:
    """JAX/Pallas re-implementation of the PyTorch GANLoss forward pass."""

    def __init__(self, gan_type, real_label_val=1.0, fake_label_val=0.0,
                 loss_weight=1.0, block_rows=None):
        if gan_type not in ("vanilla", "standard", "lsgan", "wgan",
                            "wgan_softplus", "hinge"):
            raise NotImplementedError(f"GAN type {gan_type} is not implemented.")
        self.gan_type = gan_type
        self.real_label_val = float(real_label_val)
        self.fake_label_val = float(fake_label_val)
        self.loss_weight = float(loss_weight)
        self.block_rows = block_rows  # None -> auto-size by bytes
        self._ncores = _tensorcores_per_chip()

    def _sign(self, target_is_real, is_disc):
        if self.gan_type == "wgan":
            return -1.0 if target_is_real else 1.0
        if self.gan_type == "standard":
            return -1.0 if (target_is_real or not is_disc) else 1.0
        if self.gan_type == "hinge" and not is_disc:
            return -1.0
        return 1.0

    def __call__(self, x, target_is_real, is_disc=False):
        target_is_real = bool(target_is_real)
        is_disc = bool(is_disc)

        x = jnp.asarray(x)
        n = int(x.size)
        target_val = self.real_label_val if target_is_real else self.fake_label_val
        weight = 1.0 if is_disc else self.loss_weight
        final_scale = self._sign(target_is_real, is_disc) * weight / float(n)

        ew_kwargs = dict(gan_type=self.gan_type, target_is_real=target_is_real,
                         is_disc=is_disc, target_val=target_val)

        flat = x.reshape(-1)                      # bitcast, no copy
        itemsize = int(x.dtype.itemsize)
        sub = 8 * max(1, 4 // itemsize)           # 8 f32 / 16 bf16 rows per packed tile
        unit = sub * _LANES                       # aligned element granule

        # Aligned prefix goes to the kernel; tiny (<unit) tail summed here.
        n_main = (n // unit) * unit

        if n_main == 0:
            # Tiny input: the whole reduction is < one packed tile; pure JAX.
            total = jnp.sum(_elementwise_transform(flat.astype(jnp.float32), **ew_kwargs))
            return total * jnp.float32(final_scale)

        main = flat if n_main == n else flat[:n_main]
        rows = n_main // _LANES
        x2d = main.reshape(rows, _LANES)

        # Block sizing: by bytes, sublane-pack aligned, never bigger than rows.
        if self.block_rows is None:
            target_rows = max(sub, _TARGET_BLOCK_BYTES // (_LANES * itemsize))
        else:
            target_rows = int(self.block_rows)
        block_rows = min(_round_up(target_rows, sub), rows)

        num_blocks = _cdiv(rows, block_rows)
        ncores = min(self._ncores, num_blocks)
        blocks_per_core = _cdiv(num_blocks, ncores)
        grid_blocks = ncores * blocks_per_core

        kernel = functools.partial(
            _ganloss_kernel,
            block_rows=block_rows, blocks_per_core=blocks_per_core,
            num_blocks=num_blocks, grid_blocks=grid_blocks, rows=rows,
            **ew_kwargs)

        def _in_map(c, i, _bpc=blocks_per_core, _nb=num_blocks):
            # Clamp so duplicate coverage blocks re-read a valid block
            # (their compute is skipped in-kernel).
            return (jnp.minimum(c * _bpc + i, _nb - 1), 0)

        if ncores > 1:
            dims = (getattr(pltpu, "CORE_PARALLEL", "parallel"),
                    getattr(pltpu, "ARBITRARY", "arbitrary"))
        else:
            dims = ("arbitrary", "arbitrary")

        flops_per_elem = {"vanilla": 6, "lsgan": 2, "wgan": 0, "standard": 0,
                          "wgan_softplus": 3, "hinge": 2}[self.gan_type]
        trans_per_elem = {"vanilla": 2, "wgan_softplus": 2}.get(self.gan_type, 0)
        cost = pl.CostEstimate(
            flops=(flops_per_elem + 1) * n_main,          # +1 reduction add/elem
            transcendentals=trans_per_elem * n_main,
            bytes_accessed=n_main * itemsize + ncores * 8 * _LANES * 4,
        )
        # TODO(synk): optional bf16 EUP path for vanilla/wgan_softplus on v6e/v7x
        # (kept in f32 here for accuracy/portability to v5e).

        partials = pl.pallas_call(
            kernel,
            out_shape=jax.ShapeDtypeStruct((ncores, 8, _LANES), jnp.float32),
            grid_spec=pltpu.PrefetchScalarGridSpec(
                num_scalar_prefetch=0,
                grid=(ncores, blocks_per_core),
                in_specs=[pl.BlockSpec((block_rows, _LANES), _in_map)],
                out_specs=pl.BlockSpec((1, 8, _LANES), lambda c, i: (c, 0, 0)),
            ),
            compiler_params=pltpu.CompilerParams(dimension_semantics=dims),
            cost_estimate=cost,
        )(x2d)

        total = jnp.sum(partials)
        if n_main != n:
            tail = flat[n_main:]  # < unit elements; negligible wrapper compute
            total = total + jnp.sum(
                _elementwise_transform(tail.astype(jnp.float32), **ew_kwargs))
        return total * jnp.float32(final_scale)


# -------------------- pure-JAX reference for verification --------------------
def _ref_loss(gan_type, x, target_is_real, is_disc, real_val=1.0, fake_val=0.0,
              loss_weight=1.0):
    x = x.astype(jnp.float32)
    t = real_val if target_is_real else fake_val
    if gan_type == "vanilla":
        loss = jnp.mean(jnp.maximum(x, 0) - x * t + jnp.log1p(jnp.exp(-jnp.abs(x))))
    elif gan_type == "lsgan":
        loss = jnp.mean((x - t) ** 2)
    elif gan_type == "wgan":
        loss = -jnp.mean(x) if target_is_real else jnp.mean(x)
    elif gan_type == "wgan_softplus":
        z = -x if target_is_real else x
        loss = jnp.mean(jnp.logaddexp(z, 0.0))
    elif gan_type == "hinge":
        if is_disc:
            z = -x if target_is_real else x
            loss = jnp.mean(jnp.maximum(1.0 + z, 0.0))
        else:
            loss = -jnp.mean(x)
    elif gan_type == "standard":
        if is_disc:
            loss = -jnp.mean(x) if target_is_real else jnp.mean(x)
        else:
            loss = -jnp.mean(x)
    return loss if is_disc else loss * loss_weight


if __name__ == "__main__":
    key = jax.random.PRNGKey(0)
    k0, k1, k2, k3 = jax.random.split(key, 4)
    ok = True

    def _check(tag, got, want, rtol=1e-5, atol=1e-5):
        global ok
        if not jnp.allclose(got, want, rtol=rtol, atol=atol):
            ok = False
            print(f"MISMATCH {tag}: {got} vs {want}")

    gan_types = ["vanilla", "lsgan", "wgan", "wgan_softplus", "hinge", "standard"]

    # Primary NCHW shape (exact lane fit, single block): all types / flags.
    x_main = jax.random.normal(k0, (2, 4, 16, 16), dtype=jnp.float32)
    for gt in gan_types:
        mod = GANLoss(gt, real_label_val=1.0, fake_label_val=0.0, loss_weight=0.5)
        for target_is_real in (True, False):
            for is_disc in (True, False):
                got = jax.block_until_ready(mod(x_main, target_is_real, is_disc))
                want = _ref_loss(gt, x_main, target_is_real, is_disc, loss_weight=0.5)
                _check(f"{gt} real={target_is_real} disc={is_disc}", got, want)

    # Ragged size + partial last block: exercises wrapper-tail and in-kernel mask.
    x_rag = jax.random.normal(k1, (3, 5, 23, 17), dtype=jnp.float32)  # 5865 elems
    for gt in ("vanilla", "hinge", "lsgan"):
        mod = GANLoss(gt, loss_weight=0.5, block_rows=16)
        for target_is_real in (True, False):
            got = jax.block_until_ready(mod(x_rag, target_is_real, True))
            want = _ref_loss(gt, x_rag, target_is_real, True, loss_weight=0.5)
            _check(f"ragged {gt} real={target_is_real}", got, want)

    # Multi-block accumulation path (small block_rows -> several grid steps).
    x_big = jax.random.normal(k2, (2, 4, 32, 32), dtype=jnp.float32)
    for gt in ("lsgan", "wgan_softplus"):
        mod = GANLoss(gt, loss_weight=0.5, block_rows=16)
        got = jax.block_until_ready(mod(x_big, True, False))
        want = _ref_loss(gt, x_big, True, False, loss_weight=0.5)
        _check(f"multiblock {gt}", got, want)

    # bf16 input: kernel casts per-block, wrapper makes no f32 copy.
    x_bf16 = x_main.astype(jnp.bfloat16)
    mod = GANLoss("lsgan", loss_weight=0.5)
    got = jax.block_until_ready(mod(x_bf16, True, False))
    want = _ref_loss("lsgan", x_bf16, True, False, loss_weight=0.5)
    _check("bf16 lsgan", got, want, rtol=2e-4, atol=2e-4)

    # Tiny input (< one packed tile): pure-JAX fallback path.
    x_tiny = jax.random.normal(k3, (2, 3, 11, 13), dtype=jnp.float32)
    mod = GANLoss("vanilla", loss_weight=0.5)
    got = jax.block_until_ready(mod(x_tiny, True, True))
    want = _ref_loss("vanilla", x_tiny, True, True, loss_weight=0.5)
    _check("tiny fallback", got, want)

    if ok:
        print("KERNEL_OK")
</pallas_src>

<mosaic_0001>
module attributes {stable_mosaic.version = 11 : i64} {
  func.func @_ganloss_kernel(%arg0: i32, %arg1: i32, %arg2: memref<16x128xf32, #tpu.memory_space<vmem>>, %arg3: memref<1x8x128xf32, #tpu.memory_space<vmem>>) attributes {dimension_semantics = [#tpu.dimension_semantics<arbitrary>, #tpu.dimension_semantics<arbitrary>], iteration_bounds = array<i64: 1, 1>, scalar_prefetch = 0 : i64, scratch_operands = 0 : i64, tpu.core_type = #tpu.core_type<tc>, window_params = [{transform_indices = @transform_0, window_bounds = array<i64: 16, 128>}, {transform_indices = @transform_1, window_bounds = array<i64: 1, 8, 128>}]} {
    %c0_i32 = arith.constant 0 : i32
    %0 = arith.cmpi eq, %arg1, %c0_i32 : i32
    %1 = arith.extui %0 : i1 to i32
    %c0_i32_0 = arith.constant 0 : i32
    %2 = arith.cmpi ne, %1, %c0_i32_0 : i32
    scf.if %2 {
      %cst_11 = arith.constant 0.000000e+00 : f32
      %21 = vector.broadcast %cst_11 : f32 to vector<1x8x128xf32>
      %c0_12 = arith.constant 0 : index
      %c0_13 = arith.constant 0 : index
      %c0_14 = arith.constant 0 : index
      %22 = vector.load %arg3[%c0_12, %c0_13, %c0_14] : memref<1x8x128xf32, #tpu.memory_space<vmem>>, vector<1x8x128xf32>
      tpu.vector_store %arg3[%c0_12, %c0_13, %c0_14], %21 {strides = array<i32>} : memref<1x8x128xf32, #tpu.memory_space<vmem>>, vector<1x8x128xf32>,
    } else {
    }
    %c0 = arith.constant 0 : index
    %c0_1 = arith.constant 0 : index
    %3 = vector.load %arg2[%c0, %c0_1] : memref<16x128xf32, #tpu.memory_space<vmem>>, vector<16x128xf32>
    %cst = arith.constant 0.000000e+00 : f32
    %4 = vector.broadcast %cst : f32 to vector<16x128xf32>
    %5 = arith.maximumf %3, %4 : vector<16x128xf32>
    %cst_2 = arith.constant 1.000000e+00 : f32
    %6 = vector.broadcast %cst_2 : f32 to vector<16x128xf32>
    %7 = arith.mulf %3, %6 : vector<16x128xf32>
    %8 = arith.subf %5, %7 : vector<16x128xf32>
    %9 = math.absf %3 : vector<16x128xf32>
    %cst_3 = arith.constant 0.000000e+00 : f32
    %10 = vector.broadcast %cst_3 : f32 to vector<16x128xf32>
    %11 = arith.subf %10, %9 : vector<16x128xf32>
    %12 = math.exp %11 : vector<16x128xf32>
    %13 = math.log1p %12 : vector<16x128xf32>
    %14 = arith.addf %8, %13 : vector<16x128xf32>
    %c0_4 = arith.constant 0 : index
    %c0_5 = arith.constant 0 : index
    %c0_6 = arith.constant 0 : index
    %15 = vector.load %arg3[%c0_4, %c0_5, %c0_6] : memref<1x8x128xf32, #tpu.memory_space<vmem>>, vector<1x8x128xf32>
    %16 = vector.shape_cast %14 : vector<16x128xf32> to vector<2x8x128xf32>
    %cst_7 = arith.constant dense<0.000000e+00> : vector<8x128xf32>
    %17 = vector.multi_reduction <add>, %16, %cst_7 [0] : vector<2x8x128xf32> to vector<8x128xf32>
    %18 = vector.shape_cast %17 : vector<8x128xf32> to vector<1x8x128xf32>
    %19 = arith.addf %15, %18 : vector<1x8x128xf32>
    %c0_8 = arith.constant 0 : index
    %c0_9 = arith.constant 0 : index
    %c0_10 = arith.constant 0 : index
    %20 = vector.load %arg3[%c0_8, %c0_9, %c0_10] : memref<1x8x128xf32, #tpu.memory_space<vmem>>, vector<1x8x128xf32>
    tpu.vector_store %arg3[%c0_8, %c0_9, %c0_10], %19 {strides = array<i32>} : memref<1x8x128xf32, #tpu.memory_space<vmem>>, vector<1x8x128xf32>,
    return
  }
  func.func @transform_0(%arg0: i32, %arg1: i32) -> (i32, i32) {
    %c1_i32 = arith.constant 1 : i32
    %0 = arith.muli %arg0, %c1_i32 : i32
    %1 = arith.addi %0, %arg1 : i32
    %c0_i32 = arith.constant 0 : i32
    %2 = arith.minsi %1, %c0_i32 : i32
    %c0_i32_0 = arith.constant 0 : i32
    %c0_i32_1 = arith.constant 0 : i32
    return %2, %c0_i32_0 : i32, i32
  }
  func.func @transform_1(%arg0: i32, %arg1: i32) -> (i32, i32, i32) {
    %c0_i32 = arith.constant 0 : i32
    %c0_i32_0 = arith.constant 0 : i32
    %c0_i32_1 = arith.constant 0 : i32
    return %arg0, %c0_i32, %c0_i32_0 : i32, i32, i32
  }
}

</mosaic_0001>

<llo_original>
// kernel: tpu_custom_call.1
$region0: #{tpu_custom_call.1}
  #allocation0 [shape = 'u32[]', space=smem, size = 0x4, offset = 0x4, fixed_abs, tag = 'smem constant byte address 0x4 - core index']
  #allocation1 [shape = 'u32[144,128]{1,0:T(1,128)}', space=vmem, size = 0x12000, scoped, tag = 'internal scratch']
  %s0 = inlined_call_operand.hbm [shape: f32[16,128], index: 0, kind: input, shape index: {}]
  %s1 = inlined_call_operand.hbm [shape: f32[1,8,128], index: 1, kind: output, shape index: {}]
  %s2 = sld [smem:[#allocation0]]
  $region22: #{tpu_custom_call.1} parent=0
    _
  %s4 = ssub.s32 1, %s2
  %s5 = scalar_select 0, %s4, %s2
  $region1: #{tpu_custom_call.1} parent=0
    #allocation2 [shape = 'u8[8192]{0}', space=vmem, size = 0x2000, scoped, tag = 'input window, operand 0, single buffered']
    #allocation3 [shape = 's32[1]{0}', space=sflag, size = 0x4, scoped, tag = 'scoped memory for tpu_custom_call.1']
    #allocation4 [shape = 's32[1]{0}', space=sflag, size = 0x4, scoped, tag = 'scoped memory for tpu_custom_call.1']
    #allocation5 [shape = 'u8[4096]{0}', space=vmem, size = 0x1000, scoped, tag = 'output window, operand 0, single buffered']
    %6 = vsyncpa [#allocation3], 0
    %7 = vsyncpa [#allocation4], 0
    // Predicated region
    $region2: #{tpu_custom_call.1} parent=1 // pred_check
      _
    $region3: #{tpu_custom_call.1} parent=1 // pred_check_branch
      %9 = sbr.rel (0) target = $region5
    $region4: #{tpu_custom_call.1} parent=1 // pred_region
      %s10 = sadd.s32 0, 0
      %p11 = scmp.lt.s32.totalorder %s10, 0
      %s12 = scalar_select %p11, %s10, 0
      %s13 = smul.u32 2, %s12
      %s15 = ssub.s32 256, 256
      %16 = vsyncadd [#allocation3], %s15
      %s17 = smul.addr %s13, 128
      %s18 = scalar_lea.hbm %s0, %s17
      %s19 = sshll.u32 [#allocation2], 4
      %s20 = int_to_ptr.vmem [resolvable:$true] %s19
      %25 = dma.hbm_to_vmem [thread:$0]  %s18, 256, %s20, [#allocation3], 128, 128, 8
    $region5: #{tpu_custom_call.1} parent=1 // pred_fallthru
      _
    // Predicated region
    $region6: #{tpu_custom_call.1} parent=1 // pred_check
      _
    $region7: #{tpu_custom_call.1} parent=1 // pred_check_branch
      %27 = sbr.rel (0) target = $region9
    $region8: #{tpu_custom_call.1} parent=1 // pred_region
      %28 = dma.done [#allocation3], 256
    $region9: #{tpu_custom_call.1} parent=1 // pred_fallthru
      _
    %s29 = sadd.s32 0, 0
    %p30 = scmp.lt.s32.totalorder %s29, 0
    %s31 = scalar_select %p30, %s29, 0
    %s32 = smul.u32 2, %s31
    %p33 = scmp.eq.s32.totalorder 0, 0
    // Predicated region
    $region10: #{tpu_custom_call.1} parent=1 // pred_check
      %p34 = pneg %p33
    $region11: #{tpu_custom_call.1} parent=1 // pred_check_branch
      %36 = sbr.rel (%p34) target = $region13
    $region12: #{tpu_custom_call.1} parent=1 // pred_region
      %37 = vst [vmem:[#allocation5] sm:$0xff] 0.0
    $region13: #{tpu_custom_call.1} parent=1 // pred_fallthru
      _
    %v38 = vld [vmem:[#allocation2] sm:$0xff]
    %v39 = vld [vmem:[#allocation2 + $0x8] sm:$0xff]
    %v40 = vmax.f32 %v38, 0.0
    %v41 = vmax.f32 %v39, 0.0
    %v42 = vsub.f32 %v40, %v38
    %v43 = vsub.f32 %v41, %v39
    %v44 = vand.u32 2147483647, %v38
    %v45 = vand.u32 2147483647, %v39
    %v46 = vsub.f32 0.0, %v44
    %v47 = vsub.f32 0.0, %v45
    %v48 = vmul.f32 %v46, 1.442695
    %v49 = vpow.pop %v48
    %v50 = vmul.f32 %v47, 1.442695
    %v51 = vpow.pop %v50
    %v52 = vadd.f32 %v49, 1.0
    %v53 = vlog2.pop %v52
    %v54 = vmul.f32 %v53, 0.6931472
    %v55 = vmul.f32 -0.5, %v49
    %v56 = vadd.f32 %v55, 1.0
    %v57 = vmul.f32 %v56, %v49
    %v58 = vand.u32 2147483647, %v49
    %vm59 = vcmp.lt.f32.partialorder %v58, 0.0004427343
    %v60 = vsel %vm59, %v57, %v54
    %v61 = vadd.f32 %v51, 1.0
    %v62 = vlog2.pop %v61
    %v63 = vmul.f32 %v62, 0.6931472
    %v64 = vmul.f32 -0.5, %v51
    %v65 = vadd.f32 %v64, 1.0
    %v66 = vmul.f32 %v65, %v51
    %v67 = vand.u32 2147483647, %v51
    %vm68 = vcmp.lt.f32.partialorder %v67, 0.0004427343
    %v69 = vsel %vm68, %v66, %v63
    %v70 = vadd.f32 %v42, %v60
    %v71 = vadd.f32 %v43, %v69
    %v72 = vld [vmem:[#allocation5] sm:$0xff]
    %v73 = vadd.f32 %v70, %v71
    %v74 = vadd.f32 %v72, %v73
    %75 = vst [vmem:[#allocation5] sm:$0xff] %v74
    // Predicated region
    $region14: #{tpu_custom_call.1} parent=1 // pred_check
      _
    $region15: #{tpu_custom_call.1} parent=1 // pred_check_branch
      %77 = sbr.rel (0) target = $region17
    $region16: #{tpu_custom_call.1} parent=1 // pred_region
      %s79 = ssub.s32 128, 128
      %80 = vsyncadd [#allocation4], %s79
      %s82 = sshll.u32 [#allocation5], 4
      %s83 = int_to_ptr.vmem [resolvable:$true] %s82
      %85 = dma.vmem_to_hbm [thread:$0]  %s83, 128, %s1, [#allocation4]
    $region17: #{tpu_custom_call.1} parent=1 // pred_fallthru
      _
    // Predicated region
    $region18: #{tpu_custom_call.1} parent=1 // pred_check
      _
    $region19: #{tpu_custom_call.1} parent=1 // pred_check_branch
      %87 = sbr.rel (0) target = $region21
    $region20: #{tpu_custom_call.1} parent=1 // pred_region
      %88 = dma.done [#allocation4], 128
    $region21: #{tpu_custom_call.1} parent=1 // pred_fallthru
      _
    %89 = vsyncpa [#allocation3], 1
    %90 = vsyncpa [#allocation4], 1

</llo_original>
